<compile_context>
chip_gen: v7x
topology: tpu7x:2x2x1
jax: 0.10.0
libtpu: 0.0.40
codegen_flags: <defaults>
</compile_context>

<pallas_src>
import functools

import jax
import jax.numpy as jnp
from jax import lax
from jax.experimental import pallas as pl
from jax.experimental.pallas import tpu as pltpu

_EPS = 1e-8          # torch.nn.CosineSimilarity default eps
_LANE = 128
_MAX_TILE = 8192     # lane-dense batch tile (multiple of 128); ~2 MiB VMEM/step


def _round_up(x, m):
    return ((x + m - 1) // m) * m


def _per_sample_losses(mo_ref, t0_ref, t1_ref):
    """Per-sample PIT loss for one lane-dense batch tile. Returns (1, TB) f32."""
    mo = mo_ref[...].astype(jnp.float32)   # (4, TB)
    t0 = t0_ref[...].astype(jnp.float32)   # (2, TB)
    t1 = t1_ref[...].astype(jnp.float32)   # (2, TB)

    x0, y0 = mo[0:1, :], mo[1:2, :]        # model_output[:, 0:2] (transposed)
    x1, y1 = mo[2:3, :], mo[3:4, :]        # model_output[:, 2:4]
    a0, b0 = t0[0:1, :], t0[1:2, :]
    a1, b1 = t1[0:1, :], t1[1:2, :]

    eps2 = jnp.float32(_EPS * _EPS)
    # Squared norms computed ONCE per operand, clamped per-operand like
    # torch.nn.CosineSimilarity: max(||v||, eps)^2 == max(||v||^2, eps^2).
    sq_m0 = jnp.maximum(x0 * x0 + y0 * y0, eps2)
    sq_m1 = jnp.maximum(x1 * x1 + y1 * y1, eps2)
    sq_t0 = jnp.maximum(a0 * a0 + b0 * b0, eps2)
    sq_t1 = jnp.maximum(a1 * a1 + b1 * b1, eps2)

    def ang(dot, sq_a, sq_b):
        # 1 - dot / (max(||a||,eps) * max(||b||,eps)) via one rsqrt (EUP slot).
        return 1.0 - dot * lax.rsqrt(sq_a * sq_b)

    loss_0 = ang(x0 * a0 + y0 * b0, sq_m0, sq_t0) + ang(x1 * a1 + y1 * b1, sq_m1, sq_t1)
    loss_1 = ang(x1 * a0 + y1 * b0, sq_m1, sq_t0) + ang(x0 * a1 + y0 * b1, sq_m0, sq_t1)
    return jnp.minimum(loss_0, loss_1)     # (1, TB)


def _pit_per_sample_kernel(mo_ref, t0_ref, t1_ref, out_ref):
    # Lane-dense (1, TB) unmasked store; padding sliced off in the wrapper.
    out_ref[...] = _per_sample_losses(mo_ref, t0_ref, t1_ref)


def _pit_partial_sum_kernel(mo_ref, t0_ref, t1_ref, psum_ref, *, batch, tile):
    per = _per_sample_losses(mo_ref, t0_ref, t1_ref)          # (1, tile)
    # Mask batch-padding lanes so they don't pollute the mean.
    base = pl.program_id(0) * tile
    idx = base + lax.broadcasted_iota(jnp.int32, (1, tile), 1)
    per = jnp.where(idx < batch, per, 0.0)
    # Per-lane partial sums via VPU adds only (no in-kernel cross-lane reduce).
    acc = per[:, 0:_LANE]
    for k in range(1, tile // _LANE):
        acc = acc + per[:, k * _LANE:(k + 1) * _LANE]
    psum_ref[...] = acc                                         # (1, 128)


def _prepare_inputs(model_output, targets, max_tile):
    target_0 = targets["azimuth_2d_point"]
    target_1 = targets["azimuth_2d_point_2"]

    if model_output[:, 0:2].shape != target_0.shape:
        raise ValueError(
            "Model output's shape is {}, target's is {}".format(
                model_output.shape, target_0.shape))
    if model_output[:, 2:4].shape != target_1.shape:
        raise ValueError(
            "Model output's shape is {}, target 2's is {}".format(
                model_output.shape, target_1.shape))

    batch = model_output.shape[0]
    max_tile = _round_up(max(int(max_tile), _LANE), _LANE)
    tile = min(max_tile, _round_up(batch, _LANE))
    b_pad = _round_up(batch, tile)
    num_tiles = b_pad // tile

    def to_lane_dense(x):
        xt = jnp.asarray(x).T                     # (F, B): batch on lanes
        return jnp.pad(xt, ((0, 0), (0, b_pad - batch)))

    return (to_lane_dense(model_output), to_lane_dense(target_0),
            to_lane_dense(target_1), batch, tile, num_tiles)


def pit_loss(model_output, targets, mean_reduce=True, max_tile=_MAX_TILE):
    """JAX/Pallas equivalent of PitLoss.forward."""
    mo_t, t0_t, t1_t, batch, tile, num_tiles = _prepare_inputs(
        model_output, targets, max_tile)

    in_specs = [
        pl.BlockSpec((4, tile), lambda i: (0, i)),
        pl.BlockSpec((2, tile), lambda i: (0, i)),
        pl.BlockSpec((2, tile), lambda i: (0, i)),
    ]
    cparams = pltpu.CompilerParams(dimension_semantics=("parallel",))

    if mean_reduce:
        kernel = functools.partial(_pit_partial_sum_kernel, batch=batch, tile=tile)
        partials = pl.pallas_call(
            kernel,
            out_shape=jax.ShapeDtypeStruct((1, num_tiles * _LANE), jnp.float32),
            grid_spec=pltpu.PrefetchScalarGridSpec(
                num_scalar_prefetch=0,
                grid=(num_tiles,),
                in_specs=in_specs,
                out_specs=pl.BlockSpec((1, _LANE), lambda i: (0, i)),
            ),
            compiler_params=cparams,
        )(mo_t, t0_t, t1_t)
        # Tiny final reduce in XLA keeps the kernel's grid axis fully parallel.
        return jnp.sum(partials) / jnp.float32(batch) / 2.0

    per = pl.pallas_call(
        _pit_per_sample_kernel,
        out_shape=jax.ShapeDtypeStruct((1, num_tiles * tile), jnp.float32),
        grid_spec=pltpu.PrefetchScalarGridSpec(
            num_scalar_prefetch=0,
            grid=(num_tiles,),
            in_specs=in_specs,
            out_specs=pl.BlockSpec((1, tile), lambda i: (0, i)),
        ),
        compiler_params=cparams,
    )(mo_t, t0_t, t1_t)
    return per[0, :batch]


def _reference(model_output, targets, mean_reduce=True):
    """Pure-JAX reference mirroring the PyTorch semantics."""
    t0 = targets["azimuth_2d_point"].astype(jnp.float32)
    t1 = targets["azimuth_2d_point_2"].astype(jnp.float32)
    mo = model_output.astype(jnp.float32)
    mo0, mo1 = mo[:, 0:2], mo[:, 2:4]

    def ang(a, b):
        dot = jnp.sum(a * b, axis=1)
        na = jnp.maximum(jnp.sqrt(jnp.sum(a * a, axis=1)), _EPS)
        nb = jnp.maximum(jnp.sqrt(jnp.sum(b * b, axis=1)), _EPS)
        return 1.0 - dot / (na * nb)

    l0 = ang(mo0, t0) + ang(mo1, t1)
    l1 = ang(mo1, t0) + ang(mo0, t1)
    loss = jnp.minimum(l0, l1)
    if mean_reduce:
        loss = jnp.mean(loss) / 2.0
    return loss


if __name__ == "__main__":
    key = jax.random.PRNGKey(0)

    # Case 1: small batch (single tile).
    k1, k2, k3, k4, k5, k6 = jax.random.split(key, 6)
    B = 8
    model_output = jax.random.normal(k1, (B, 4), dtype=jnp.float32)
    targets = {
        "azimuth_2d_point": jax.random.normal(k2, (B, 2), dtype=jnp.float32),
        "azimuth_2d_point_2": jax.random.normal(k3, (B, 2), dtype=jnp.float32),
    }
    out_mean = jax.block_until_ready(pit_loss(model_output, targets, mean_reduce=True))
    out_per = jax.block_until_ready(pit_loss(model_output, targets, mean_reduce=False))
    ref_mean = _reference(model_output, targets, mean_reduce=True)
    ref_per = _reference(model_output, targets, mean_reduce=False)
    assert jnp.allclose(out_mean, ref_mean, atol=1e-5, rtol=1e-5), (out_mean, ref_mean)
    assert jnp.allclose(out_per, ref_per, atol=1e-5, rtol=1e-5), (out_per, ref_per)

    # Case 2: batch not a multiple of the tile, multiple grid steps (max_tile=128).
    B2 = 300
    model_output2 = jax.random.normal(k4, (B2, 4), dtype=jnp.float32)
    targets2 = {
        "azimuth_2d_point": jax.random.normal(k5, (B2, 2), dtype=jnp.float32),
        "azimuth_2d_point_2": jax.random.normal(k6, (B2, 2), dtype=jnp.float32),
    }
    out_mean2 = jax.block_until_ready(
        pit_loss(model_output2, targets2, mean_reduce=True, max_tile=128))
    out_per2 = jax.block_until_ready(
        pit_loss(model_output2, targets2, mean_reduce=False, max_tile=128))
    ref_mean2 = _reference(model_output2, targets2, mean_reduce=True)
    ref_per2 = _reference(model_output2, targets2, mean_reduce=False)
    assert jnp.allclose(out_mean2, ref_mean2, atol=1e-5, rtol=1e-5), (out_mean2, ref_mean2)
    assert jnp.allclose(out_per2, ref_per2, atol=1e-5, rtol=1e-5), (out_per2, ref_per2)

    print("KERNEL_OK")
</pallas_src>

<mosaic_0001>
module attributes {stable_mosaic.version = 11 : i64} {
  func.func @_pit_partial_sum_kernel(%arg0: i32, %arg1: memref<4x128xf32, #tpu.memory_space<vmem>>, %arg2: memref<2x128xf32, #tpu.memory_space<vmem>>, %arg3: memref<2x128xf32, #tpu.memory_space<vmem>>, %arg4: memref<1x128xf32, #tpu.memory_space<vmem>>) attributes {dimension_semantics = [#tpu.dimension_semantics<parallel>], iteration_bounds = array<i64: 1>, scalar_prefetch = 0 : i64, scratch_operands = 0 : i64, tpu.core_type = #tpu.core_type<tc>, window_params = [{transform_indices = @transform_0, window_bounds = array<i64: 4, 128>}, {transform_indices = @transform_1, window_bounds = array<i64: 2, 128>}, {transform_indices = @transform_2, window_bounds = array<i64: 2, 128>}, {transform_indices = @transform_3, window_bounds = array<i64: 1, 128>}]} {
    %c0 = arith.constant 0 : index
    %c0_0 = arith.constant 0 : index
    %0 = vector.load %arg1[%c0, %c0_0] : memref<4x128xf32, #tpu.memory_space<vmem>>, vector<4x128xf32>
    %c0_1 = arith.constant 0 : index
    %c0_2 = arith.constant 0 : index
    %1 = vector.load %arg2[%c0_1, %c0_2] : memref<2x128xf32, #tpu.memory_space<vmem>>, vector<2x128xf32>
    %c0_3 = arith.constant 0 : index
    %c0_4 = arith.constant 0 : index
    %2 = vector.load %arg3[%c0_3, %c0_4] : memref<2x128xf32, #tpu.memory_space<vmem>>, vector<2x128xf32>
    %3 = vector.extract_strided_slice %0 {offsets = [0, 0], sizes = [1, 128], strides = [1, 1]} : vector<4x128xf32> to vector<1x128xf32>
    %4 = vector.extract_strided_slice %0 {offsets = [1, 0], sizes = [1, 128], strides = [1, 1]} : vector<4x128xf32> to vector<1x128xf32>
    %5 = vector.extract_strided_slice %0 {offsets = [2, 0], sizes = [1, 128], strides = [1, 1]} : vector<4x128xf32> to vector<1x128xf32>
    %6 = vector.extract_strided_slice %0 {offsets = [3, 0], sizes = [1, 128], strides = [1, 1]} : vector<4x128xf32> to vector<1x128xf32>
    %7 = vector.extract_strided_slice %1 {offsets = [0, 0], sizes = [1, 128], strides = [1, 1]} : vector<2x128xf32> to vector<1x128xf32>
    %8 = vector.extract_strided_slice %1 {offsets = [1, 0], sizes = [1, 128], strides = [1, 1]} : vector<2x128xf32> to vector<1x128xf32>
    %9 = vector.extract_strided_slice %2 {offsets = [0, 0], sizes = [1, 128], strides = [1, 1]} : vector<2x128xf32> to vector<1x128xf32>
    %10 = vector.extract_strided_slice %2 {offsets = [1, 0], sizes = [1, 128], strides = [1, 1]} : vector<2x128xf32> to vector<1x128xf32>
    %11 = arith.mulf %3, %3 : vector<1x128xf32>
    %12 = arith.mulf %4, %4 : vector<1x128xf32>
    %13 = arith.addf %11, %12 : vector<1x128xf32>
    %cst = arith.constant 1.000000e-16 : f32
    %14 = vector.broadcast %cst : f32 to vector<1x128xf32>
    %15 = arith.maximumf %13, %14 : vector<1x128xf32>
    %16 = arith.mulf %5, %5 : vector<1x128xf32>
    %17 = arith.mulf %6, %6 : vector<1x128xf32>
    %18 = arith.addf %16, %17 : vector<1x128xf32>
    %cst_5 = arith.constant 1.000000e-16 : f32
    %19 = vector.broadcast %cst_5 : f32 to vector<1x128xf32>
    %20 = arith.maximumf %18, %19 : vector<1x128xf32>
    %21 = arith.mulf %7, %7 : vector<1x128xf32>
    %22 = arith.mulf %8, %8 : vector<1x128xf32>
    %23 = arith.addf %21, %22 : vector<1x128xf32>
    %cst_6 = arith.constant 1.000000e-16 : f32
    %24 = vector.broadcast %cst_6 : f32 to vector<1x128xf32>
    %25 = arith.maximumf %23, %24 : vector<1x128xf32>
    %26 = arith.mulf %9, %9 : vector<1x128xf32>
    %27 = arith.mulf %10, %10 : vector<1x128xf32>
    %28 = arith.addf %26, %27 : vector<1x128xf32>
    %cst_7 = arith.constant 1.000000e-16 : f32
    %29 = vector.broadcast %cst_7 : f32 to vector<1x128xf32>
    %30 = arith.maximumf %28, %29 : vector<1x128xf32>
    %31 = arith.mulf %3, %7 : vector<1x128xf32>
    %32 = arith.mulf %4, %8 : vector<1x128xf32>
    %33 = arith.addf %31, %32 : vector<1x128xf32>
    %34 = arith.mulf %15, %25 : vector<1x128xf32>
    %35 = math.rsqrt %34 : vector<1x128xf32>
    %36 = arith.mulf %33, %35 : vector<1x128xf32>
    %cst_8 = arith.constant 1.000000e+00 : f32
    %37 = vector.broadcast %cst_8 : f32 to vector<1x128xf32>
    %38 = arith.subf %37, %36 : vector<1x128xf32>
    %39 = arith.mulf %5, %9 : vector<1x128xf32>
    %40 = arith.mulf %6, %10 : vector<1x128xf32>
    %41 = arith.addf %39, %40 : vector<1x128xf32>
    %42 = arith.mulf %20, %30 : vector<1x128xf32>
    %43 = math.rsqrt %42 : vector<1x128xf32>
    %44 = arith.mulf %41, %43 : vector<1x128xf32>
    %cst_9 = arith.constant 1.000000e+00 : f32
    %45 = vector.broadcast %cst_9 : f32 to vector<1x128xf32>
    %46 = arith.subf %45, %44 : vector<1x128xf32>
    %47 = arith.addf %38, %46 : vector<1x128xf32>
    %48 = arith.mulf %5, %7 : vector<1x128xf32>
    %49 = arith.mulf %6, %8 : vector<1x128xf32>
    %50 = arith.addf %48, %49 : vector<1x128xf32>
    %51 = arith.mulf %20, %25 : vector<1x128xf32>
    %52 = math.rsqrt %51 : vector<1x128xf32>
    %53 = arith.mulf %50, %52 : vector<1x128xf32>
    %cst_10 = arith.constant 1.000000e+00 : f32
    %54 = vector.broadcast %cst_10 : f32 to vector<1x128xf32>
    %55 = arith.subf %54, %53 : vector<1x128xf32>
    %56 = arith.mulf %3, %9 : vector<1x128xf32>
    %57 = arith.mulf %4, %10 : vector<1x128xf32>
    %58 = arith.addf %56, %57 : vector<1x128xf32>
    %59 = arith.mulf %15, %30 : vector<1x128xf32>
    %60 = math.rsqrt %59 : vector<1x128xf32>
    %61 = arith.mulf %58, %60 : vector<1x128xf32>
    %cst_11 = arith.constant 1.000000e+00 : f32
    %62 = vector.broadcast %cst_11 : f32 to vector<1x128xf32>
    %63 = arith.subf %62, %61 : vector<1x128xf32>
    %64 = arith.addf %55, %63 : vector<1x128xf32>
    %65 = arith.minimumf %47, %64 : vector<1x128xf32>
    %c128_i32 = arith.constant 128 : i32
    %66 = arith.muli %arg0, %c128_i32 : i32
    %67 = tpu.iota {dimensions = array<i32: 1>} : vector<1x128xi32>
    %68 = vector.broadcast %66 : i32 to vector<1x128xi32>
    %69 = arith.addi %68, %67 : vector<1x128xi32>
    %c8_i32 = arith.constant 8 : i32
    %70 = vector.broadcast %c8_i32 : i32 to vector<1x128xi32>
    %71 = arith.cmpi slt, %69, %70 : vector<1x128xi32>
    %cst_12 = arith.constant 0.000000e+00 : f32
    %72 = vector.broadcast %cst_12 : f32 to vector<1x128xf32>
    %73 = arith.select %71, %65, %72 : vector<1x128xi1>, vector<1x128xf32>
    %c0_13 = arith.constant 0 : index
    %c0_14 = arith.constant 0 : index
    %74 = vector.load %arg4[%c0_13, %c0_14] : memref<1x128xf32, #tpu.memory_space<vmem>>, vector<1x128xf32>
    tpu.vector_store %arg4[%c0_13, %c0_14], %73 {strides = array<i32>} : memref<1x128xf32, #tpu.memory_space<vmem>>, vector<1x128xf32>,
    return
  }
  func.func @transform_0(%arg0: i32) -> (i32, i32) {
    %c0_i32 = arith.constant 0 : i32
    %c0_i32_0 = arith.constant 0 : i32
    return %c0_i32, %arg0 : i32, i32
  }
  func.func @transform_1(%arg0: i32) -> (i32, i32) {
    %c0_i32 = arith.constant 0 : i32
    %c0_i32_0 = arith.constant 0 : i32
    return %c0_i32, %arg0 : i32, i32
  }
  func.func @transform_2(%arg0: i32) -> (i32, i32) {
    %c0_i32 = arith.constant 0 : i32
    %c0_i32_0 = arith.constant 0 : i32
    return %c0_i32, %arg0 : i32, i32
  }
  func.func @transform_3(%arg0: i32) -> (i32, i32) {
    %c0_i32 = arith.constant 0 : i32
    %c0_i32_0 = arith.constant 0 : i32
    return %c0_i32, %arg0 : i32, i32
  }
}

</mosaic_0001>

<llo_original>
// kernel: tpu_custom_call.1
$region0: #{tpu_custom_call.1}
  #allocation0 [shape = 'u32[]', space=smem, size = 0x4, offset = 0x4, fixed_abs, tag = 'smem constant byte address 0x4 - core index']
  #allocation1 [shape = 'u32[144,128]{1,0:T(1,128)}', space=vmem, size = 0x12000, scoped, tag = 'internal scratch']
  %s0 = inlined_call_operand.hbm [shape: f32[4,128], index: 0, kind: input, shape index: {}]
  %s1 = inlined_call_operand.vmem [shape: f32[2,128], index: 1, kind: input, shape index: {}]
  %s2 = inlined_call_operand.vmem [shape: f32[2,128], index: 2, kind: input, shape index: {}]
  %s3 = inlined_call_operand.hbm [shape: f32[1,128], index: 3, kind: output, shape index: {}]
  %s4 = sld [smem:[#allocation0]]
  $region26: #{tpu_custom_call.1} parent=0
    _
  %s6 = ssub.s32 1, %s4
  %s7 = scalar_select 0, %s6, %s4
  $region1: #{tpu_custom_call.1} parent=0
    #allocation2 [shape = 'u8[2048]{0}', space=vmem, size = 0x800, scoped, tag = 'input window, operand 0, single buffered']
    #allocation3 [shape = 's32[1]{0}', space=sflag, size = 0x4, scoped, tag = 'scoped memory for tpu_custom_call.1']
    #allocation4 [shape = 's32[1]{0}', space=sflag, size = 0x4, scoped, tag = 'scoped memory for tpu_custom_call.1']
    #allocation5 [shape = 'u8[512]{0}', space=vmem, size = 0x400, scoped, tag = 'output window, operand 0, single buffered']
    %8 = vsyncpa [#allocation3], 0
    %9 = vsyncpa [#allocation4], 0
    // Predicated region
    $region2: #{tpu_custom_call.1} parent=1 // pred_check
      _
    $region3: #{tpu_custom_call.1} parent=1 // pred_check_branch
      %11 = sbr.rel (0) target = $region5
    $region4: #{tpu_custom_call.1} parent=1 // pred_region
      %s13 = ssub.s32 64, 64
      %14 = vsyncadd [#allocation3], %s13
      %s16 = sshll.u32 [#allocation2], 4
      %s17 = int_to_ptr.vmem [resolvable:$true] %s16
      %19 = dma.hbm_to_vmem [thread:$0]  %s0, 64, %s17, [#allocation3]
    $region5: #{tpu_custom_call.1} parent=1 // pred_fallthru
      _
    // Predicated region
    $region6: #{tpu_custom_call.1} parent=1 // pred_check
      _
    $region7: #{tpu_custom_call.1} parent=1 // pred_check_branch
      %21 = sbr.rel (0) target = $region9
    $region8: #{tpu_custom_call.1} parent=1 // pred_region
      _
    $region9: #{tpu_custom_call.1} parent=1 // pred_fallthru
      _
    // Predicated region
    $region10: #{tpu_custom_call.1} parent=1 // pred_check
      _
    $region11: #{tpu_custom_call.1} parent=1 // pred_check_branch
      %23 = sbr.rel (0) target = $region13
    $region12: #{tpu_custom_call.1} parent=1 // pred_region
      _
    $region13: #{tpu_custom_call.1} parent=1 // pred_fallthru
      _
    // Predicated region
    $region14: #{tpu_custom_call.1} parent=1 // pred_check
      _
    $region15: #{tpu_custom_call.1} parent=1 // pred_check_branch
      %25 = sbr.rel (0) target = $region17
    $region16: #{tpu_custom_call.1} parent=1 // pred_region
      %26 = dma.done [#allocation3], 64
    $region17: #{tpu_custom_call.1} parent=1 // pred_fallthru
      _
    %v27 = vld [vmem:[#allocation2] sm:$0xf]
    %v28 = vld [vmem:[%s1] sm:$0x3]
    %v29 = vld [vmem:[%s2] sm:$0x3]
    %v30 = vmul.f32 %v27, %v27
    %v32 = vrot.slane %v30, 1
    %v34 = vadd.f32 %v30, %v32
    %v35 = vmax.f32 %v34, 1e-16
    %v36 = vmul.f32 %v28, %v28
    %v38 = vrot.slane %v36, 1
    %v40 = vadd.f32 %v36, %v38
    %v41 = vmax.f32 %v40, 1e-16
    %v42 = vmul.f32 %v29, %v29
    %v44 = vrot.slane %v42, 1
    %v46 = vadd.f32 %v42, %v44
    %v47 = vmax.f32 %v46, 1e-16
    %v48 = vmul.f32 %v27, %v28
    %v50 = vrot.slane %v48, 1
    %v52 = vadd.f32 %v48, %v50
    %v53 = vmul.f32 %v35, %v41
    %v54 = vrsqrt.pop %v53
    %v55 = vmul.f32 %v52, %v54
    %v56 = vsub.f32 1.0, %v55
    %v58 = vrot.slane %v29, 6
    %v60 = vmul.f32 %v27, %v58
    %v62 = vrot.slane %v60, 1
    %v64 = vadd.f32 %v60, %v62
    %v66 = vrot.slane %v47, 6
    %v68 = vmul.f32 %v35, %v66
    %v69 = vrsqrt.pop %v68
    %v70 = vmul.f32 %v64, %v69
    %v71 = vsub.f32 1.0, %v70
    %v73 = vrot.slane %v71, 2
    %v75 = vadd.f32 %v56, %v73
    %v77 = vrot.slane %v28, 6
    %v79 = vmul.f32 %v27, %v77
    %v81 = vrot.slane %v79, 1
    %v83 = vadd.f32 %v79, %v81
    %v85 = vrot.slane %v41, 6
    %v87 = vmul.f32 %v35, %v85
    %v88 = vrsqrt.pop %v87
    %v89 = vmul.f32 %v83, %v88
    %v90 = vsub.f32 1.0, %v89
    %v91 = vmul.f32 %v27, %v29
    %v93 = vrot.slane %v91, 1
    %v95 = vadd.f32 %v91, %v93
    %v96 = vmul.f32 %v35, %v47
    %v97 = vrsqrt.pop %v96
    %v98 = vmul.f32 %v95, %v97
    %v99 = vsub.f32 1.0, %v98
    %v101 = vrot.slane %v99, 6
    %v103 = vadd.f32 %v90, %v101
    %v105 = vrot.slane %v103, 2
    %v107 = vmin.f32 %v75, %v105
    %s108 = smul.u32 0, 128
    %v109 = vlaneseq
    %v110 = vand.u32 %v109, 127
    %v111 = vstv %s108
    %v112 = vadd.s32 %v111, %v110
    %vm113 = vcmp.lt.s32.totalorder %v112, 8
    %v114 = vsel %vm113, %v107, 0.0
    %115 = vst [vmem:[#allocation5] sm:$0x1] %v114
    // Predicated region
    $region18: #{tpu_custom_call.1} parent=1 // pred_check
      _
    $region19: #{tpu_custom_call.1} parent=1 // pred_check_branch
      %117 = sbr.rel (0) target = $region21
    $region20: #{tpu_custom_call.1} parent=1 // pred_region
      %s119 = ssub.s32 16, 16
      %120 = vsyncadd [#allocation4], %s119
      %s122 = sshll.u32 [#allocation5], 4
      %s123 = int_to_ptr.vmem [resolvable:$true] %s122
      %125 = dma.vmem_to_hbm [thread:$0]  %s123, 16, %s3, [#allocation4]
    $region21: #{tpu_custom_call.1} parent=1 // pred_fallthru
      _
    // Predicated region
    $region22: #{tpu_custom_call.1} parent=1 // pred_check
      _
    $region23: #{tpu_custom_call.1} parent=1 // pred_check_branch
      %127 = sbr.rel (0) target = $region25
    $region24: #{tpu_custom_call.1} parent=1 // pred_region
      %128 = dma.done [#allocation4], 16
    $region25: #{tpu_custom_call.1} parent=1 // pred_fallthru
      _
    %129 = vsyncpa [#allocation3], 1
    %130 = vsyncpa [#allocation4], 1

</llo_original>
